<compile_context>
chip_gen: v7x
topology: tpu7x:2x2x1
jax: 0.10.0
libtpu: 0.0.40
codegen_flags: <defaults>
</compile_context>

<pallas_src>
import functools
import math

import jax
import jax.numpy as jnp
from jax import lax
from jax.experimental import pallas as pl
from jax.experimental.pallas import tpu as pltpu


_VMEM_LIMIT = 48 * 1024 * 1024  # >=16 MiB headroom on v7x (64 MiB physical VMEM)
_NEG_INF = -1e30                # large-negative instead of -inf avoids inf-inf NaNs


def _pick_tile(dim: int, target: int) -> int:
    """Largest tile <= target that divides dim (halving), else the full dim."""
    t = min(target, dim)
    while t > 8 and dim % t != 0:
        t //= 2
    return t if dim % t == 0 else dim


# ---------------------------------------------------------------------------
# Tiled linear (y = x @ w + b) with K-reduction accumulator, bf16 MXU operands
# ---------------------------------------------------------------------------
def _linear_kernel(x_ref, w_ref, b_ref, o_ref, acc_ref, *, mxu_dtype):
    k = pl.program_id(2)

    @pl.when(k == 0)
    def _init():
        acc_ref[...] = jnp.zeros_like(acc_ref)

    x = x_ref[...].astype(mxu_dtype)
    w = w_ref[...].astype(mxu_dtype)
    acc_ref[...] += jnp.dot(x, w, preferred_element_type=jnp.float32)

    @pl.when(k == pl.num_programs(2) - 1)
    def _finalize():
        o_ref[...] = (acc_ref[...] + b_ref[...].astype(jnp.float32)).astype(
            o_ref.dtype
        )


def linear(x2d, w, b, *, out_dtype=None, mxu_dtype=jnp.bfloat16,
           tm=512, tn=512, tk=1024):
    """y = x2d @ w + b, w stored as (Din, Dout). f32 accumulation in VMEM."""
    M, K = x2d.shape
    K2, N = w.shape
    assert K == K2
    out_dtype = out_dtype if out_dtype is not None else x2d.dtype
    tm = _pick_tile(M, tm)
    tn = _pick_tile(N, tn)
    tk = _pick_tile(K, tk)
    grid = (M // tm, N // tn, K // tk)

    bytes_accessed = (
        M * K * jnp.dtype(x2d.dtype).itemsize
        + K * N * jnp.dtype(w.dtype).itemsize
        + N * 4
        + M * N * jnp.dtype(out_dtype).itemsize
    )
    cost = pl.CostEstimate(flops=2 * M * N * K, transcendentals=0,
                           bytes_accessed=bytes_accessed)

    return pl.pallas_call(
        functools.partial(_linear_kernel, mxu_dtype=mxu_dtype),
        out_shape=jax.ShapeDtypeStruct((M, N), out_dtype),
        grid=grid,
        in_specs=[
            pl.BlockSpec((tm, tk), lambda i, j, k: (i, k)),
            pl.BlockSpec((tk, tn), lambda i, j, k: (k, j)),
            pl.BlockSpec((1, tn), lambda i, j, k: (0, j)),
        ],
        out_specs=pl.BlockSpec((tm, tn), lambda i, j, k: (i, j)),
        scratch_shapes=[pltpu.VMEM((tm, tn), jnp.float32)],
        compiler_params=pltpu.CompilerParams(
            dimension_semantics=("parallel", "parallel", "arbitrary"),
            vmem_limit_bytes=_VMEM_LIMIT,
        ),
        cost_estimate=cost,
    )(x2d, w, b.reshape(1, N))


# ---------------------------------------------------------------------------
# Output projection with 'head' as the K-reduction axis (no merge transpose)
#   out[b, s, :] = sum_h attn[b*H+h, s, :] @ Wo[h] + bo
# ---------------------------------------------------------------------------
def _out_proj_kernel(a_ref, w_ref, b_ref, o_ref, acc_ref, *, mxu_dtype):
    h = pl.program_id(3)

    @pl.when(h == 0)
    def _init():
        acc_ref[...] = jnp.zeros_like(acc_ref)

    a = a_ref[0].astype(mxu_dtype)      # (tm, Dh)
    w = w_ref[0].astype(mxu_dtype)      # (Dh, tn)
    acc_ref[...] += jnp.dot(a, w, preferred_element_type=jnp.float32)

    @pl.when(h == pl.num_programs(3) - 1)
    def _finalize():
        o_ref[0] = (acc_ref[...] + b_ref[...].astype(jnp.float32)).astype(
            o_ref.dtype
        )


def out_projection(attn_out, wo_h, bo, *, B, H, out_dtype,
                   mxu_dtype=jnp.bfloat16, tm=512, tn=512):
    """attn_out: (B*H, Sq, Dh); wo_h: (H, Dh, D); returns (B, Sq, D)."""
    BH, Sq, Dh = attn_out.shape
    _, _, D = wo_h.shape
    assert BH == B * H
    tm = _pick_tile(Sq, tm)
    tn = _pick_tile(D, tn)
    grid = (B, Sq // tm, D // tn, H)

    cost = pl.CostEstimate(
        flops=2 * B * H * Sq * Dh * D,
        transcendentals=0,
        bytes_accessed=(BH * Sq * Dh * jnp.dtype(attn_out.dtype).itemsize
                        + H * Dh * D * jnp.dtype(wo_h.dtype).itemsize
                        + D * 4
                        + B * Sq * D * jnp.dtype(out_dtype).itemsize),
    )

    return pl.pallas_call(
        functools.partial(_out_proj_kernel, mxu_dtype=mxu_dtype),
        out_shape=jax.ShapeDtypeStruct((B, Sq, D), out_dtype),
        grid=grid,
        in_specs=[
            pl.BlockSpec((1, tm, Dh), lambda b, i, j, h: (b * H + h, i, 0)),
            pl.BlockSpec((1, Dh, tn), lambda b, i, j, h: (h, 0, j)),
            pl.BlockSpec((1, tn), lambda b, i, j, h: (0, j)),
        ],
        out_specs=pl.BlockSpec((1, tm, tn), lambda b, i, j, h: (b, i, j)),
        scratch_shapes=[pltpu.VMEM((tm, tn), jnp.float32)],
        compiler_params=pltpu.CompilerParams(
            dimension_semantics=("parallel", "parallel", "parallel", "arbitrary"),
            vmem_limit_bytes=_VMEM_LIMIT,
        ),
        cost_estimate=cost,
    )(attn_out, wo_h, bo.reshape(1, D))


# ---------------------------------------------------------------------------
# Flash-style (KV-tiled) scaled dot-product attention
# ---------------------------------------------------------------------------
def _flash_body(q_ref, k_ref, v_ref, mask_ref, o_ref, m_sc, l_sc, acc_sc,
                *, causal, mxu_dtype):
    qi = pl.program_id(1)
    ki = pl.program_id(2)
    tq = q_ref.shape[1]
    tk = k_ref.shape[1]

    @pl.when(ki == 0)
    def _init():
        m_sc[...] = jnp.full_like(m_sc, _NEG_INF)
        l_sc[...] = jnp.zeros_like(l_sc)
        acc_sc[...] = jnp.zeros_like(acc_sc)

    def compute():
        # Q is pre-scaled by 1/sqrt(Dh) (folded into Wq/bq at parameter build).
        q = q_ref[0].astype(mxu_dtype)   # (tq, Dh)
        k = k_ref[0].astype(mxu_dtype)   # (tk, Dh)
        # Q @ K^T without forming a transposed K tile.
        s = lax.dot_general(
            q, k, dimension_numbers=(((1,), (1,)), ((), ())),
            preferred_element_type=jnp.float32,
        )                                 # (tq, tk), f32
        if mask_ref is not None:
            s = s + mask_ref[0]
        if causal:
            row = qi * tq + lax.broadcasted_iota(jnp.int32, (tq, tk), 0)
            col = ki * tk + lax.broadcasted_iota(jnp.int32, (tq, tk), 1)
            s = jnp.where(col <= row, s, _NEG_INF)

        m_prev = m_sc[...]
        m_new = jnp.maximum(m_prev, jnp.max(s, axis=-1, keepdims=True))
        alpha = jnp.exp(m_prev - m_new)
        p = jnp.exp(s - m_new)
        l_sc[...] = alpha * l_sc[...] + jnp.sum(p, axis=-1, keepdims=True)
        acc_sc[...] = alpha * acc_sc[...] + jnp.dot(
            p.astype(mxu_dtype), v_ref[0].astype(mxu_dtype),
            preferred_element_type=jnp.float32,
        )
        m_sc[...] = m_new

    if causal:
        # Skip KV tiles that lie entirely above the diagonal.
        @pl.when(ki * tk <= qi * tq + (tq - 1))
        def _():
            compute()
    else:
        compute()

    @pl.when(ki == pl.num_programs(2) - 1)
    def _finalize():
        o_ref[0] = (
            acc_sc[...] * pl.reciprocal(l_sc[...], approx=True)
        ).astype(o_ref.dtype)


def _flash_kernel(q_ref, k_ref, v_ref, o_ref, m_sc, l_sc, acc_sc,
                  *, causal, mxu_dtype):
    _flash_body(q_ref, k_ref, v_ref, None, o_ref, m_sc, l_sc, acc_sc,
                causal=causal, mxu_dtype=mxu_dtype)


def _flash_kernel_masked(q_ref, k_ref, v_ref, mask_ref, o_ref, m_sc, l_sc,
                         acc_sc, *, causal, mxu_dtype):
    _flash_body(q_ref, k_ref, v_ref, mask_ref, o_ref, m_sc, l_sc, acc_sc,
                causal=causal, mxu_dtype=mxu_dtype)


def _prep_mask(mask, B, H, Sq, Sk):
    """Normalize an additive mask to (Mb*Mh, Sq, Sk) WITHOUT expanding B/H."""
    m = jnp.asarray(mask, jnp.float32)
    assert m.ndim <= 4, "mask rank must be <= 4"
    while m.ndim < 4:
        m = m[None]
    mb, mh = m.shape[0], m.shape[1]
    assert mb in (1, B) and mh in (1, H), "mask batch/head dims must be 1 or full"
    m = jnp.broadcast_to(m, (mb, mh, Sq, Sk)).reshape(mb * mh, Sq, Sk)
    if mb == 1 and mh == 1:
        idx = lambda bh: 0
    elif mh == 1:
        idx = lambda bh: bh // H
    elif mb == 1:
        idx = lambda bh: bh % H
    else:
        idx = lambda bh: bh
    return m, idx


def flash_attention(q, k, v, mask=None, *, n_head, causal=False,
                    mxu_dtype=jnp.bfloat16, out_dtype=None, tq=512, tk=512):
    """q, k, v: (B*H, S, Dh), Q already pre-scaled.  mask: additive or causal."""
    BH, Sq, Dh = q.shape
    Sk = k.shape[1]
    H = n_head
    B = BH // H
    out_dtype = out_dtype if out_dtype is not None else q.dtype
    if causal:
        assert Sq == Sk, "causal=True requires Sq == Sk"
    tq = _pick_tile(Sq, tq)
    tk = _pick_tile(Sk, tk)
    grid = (BH, Sq // tq, Sk // tk)

    q_spec = pl.BlockSpec((1, tq, Dh), lambda bh, qi, ki: (bh, qi, 0))
    o_spec = pl.BlockSpec((1, tq, Dh), lambda bh, qi, ki: (bh, qi, 0))
    if causal:
        # Clamp the KV block index past the diagonal: the pipeline sees an
        # unchanged index on fully-masked steps and skips the redundant DMA.
        def kv_idx(bh, qi, ki):
            last_needed = (qi * tq + (tq - 1)) // tk
            return (bh, jnp.minimum(ki, last_needed), 0)
    else:
        def kv_idx(bh, qi, ki):
            return (bh, ki, 0)
    kv_spec = pl.BlockSpec((1, tk, Dh), kv_idx)

    scratch = [
        pltpu.VMEM((tq, 1), jnp.float32),    # running row-max
        pltpu.VMEM((tq, 1), jnp.float32),    # running row-sum
        pltpu.VMEM((tq, Dh), jnp.float32),   # output accumulator
    ]
    cparams = pltpu.CompilerParams(
        dimension_semantics=("parallel", "parallel", "arbitrary"),
        vmem_limit_bytes=_VMEM_LIMIT,
    )
    out_shape = jax.ShapeDtypeStruct((BH, Sq, Dh), out_dtype)
    itemsize = jnp.dtype(q.dtype).itemsize
    bytes_accessed = (BH * Sq * Dh + 2 * (Sq // tq) * BH * Sk * Dh) * itemsize \
        + BH * Sq * Dh * jnp.dtype(out_dtype).itemsize

    if mask is None:
        cost = pl.CostEstimate(flops=4 * BH * Sq * Sk * Dh,
                               transcendentals=BH * Sq * Sk,
                               bytes_accessed=bytes_accessed)
        kernel = functools.partial(_flash_kernel, causal=causal,
                                   mxu_dtype=mxu_dtype)
        return pl.pallas_call(
            kernel, out_shape=out_shape, grid=grid,
            in_specs=[q_spec, kv_spec, kv_spec],
            out_specs=o_spec, scratch_shapes=scratch,
            compiler_params=cparams, cost_estimate=cost,
        )(q, k, v)

    mask_arr, midx = _prep_mask(mask, B, H, Sq, Sk)
    mask_spec = pl.BlockSpec((1, tq, tk), lambda bh, qi, ki: (midx(bh), qi, ki))
    cost = pl.CostEstimate(flops=4 * BH * Sq * Sk * Dh,
                           transcendentals=BH * Sq * Sk,
                           bytes_accessed=bytes_accessed + mask_arr.size * 4)
    kernel = functools.partial(_flash_kernel_masked, causal=causal,
                               mxu_dtype=mxu_dtype)
    return pl.pallas_call(
        kernel, out_shape=out_shape, grid=grid,
        in_specs=[q_spec, kv_spec, kv_spec, mask_spec],
        out_specs=o_spec, scratch_shapes=scratch,
        compiler_params=cparams, cost_estimate=cost,
    )(q, k, v, mask_arr)


# ---------------------------------------------------------------------------
# MultiHeadAttention module (parameters in plain JAX, hot path in Pallas)
# ---------------------------------------------------------------------------
def _split_heads(x2d, B, S, H, Dh):
    # (B*S, D) -> (B*H, S, Dh).  XLA glue; fusing it into attention BlockSpecs
    # needs Dh % 128 == 0 (the (8,128) block constraint), so it stays here.
    return x2d.reshape(B, S, H, Dh).transpose(0, 2, 1, 3).reshape(B * H, S, Dh)


class MultiHeadAttention:
    def __init__(self, d_model: int, n_head: int, key, *,
                 mxu_dtype=jnp.bfloat16):
        assert d_model % n_head == 0, "d_model must be divisible by num_heads"
        self.d_model = d_model
        self.n_head = n_head
        self.d_tensor = d_model // n_head
        self.mxu_dtype = mxu_dtype

        # nn.Linear default init: U(-1/sqrt(in), 1/sqrt(in)) for weight & bias.
        bound = 1.0 / math.sqrt(d_model)
        keys = jax.random.split(key, 8)

        def init_linear(kw, kb):
            # stored as (in, out) == W^T of torch's (out, in)
            w = jax.random.uniform(kw, (d_model, d_model), jnp.float32, -bound, bound)
            b = jax.random.uniform(kb, (d_model,), jnp.float32, -bound, bound)
            return w, b

        self.wq, self.bq = init_linear(keys[0], keys[1])
        self.wk, self.bk = init_linear(keys[2], keys[3])
        self.wv, self.bv = init_linear(keys[4], keys[5])
        self.wo, self.bo = init_linear(keys[6], keys[7])

        # Derived kernel-side parameters:
        #  * 1/sqrt(Dh) folded into the Q projection (one-time transform).
        #  * Q/K/V packed into one (D, 3D) weight so x streams from HBM once.
        #  * Weights pre-cast to the MXU dtype (halves weight HBM traffic).
        #  * Wo reshaped to (H, Dh, D): heads become the output-projection
        #    reduction axis (eliminates the head-merge transpose).
        scale = 1.0 / math.sqrt(self.d_tensor)
        wqkv = jnp.concatenate([self.wq * scale, self.wk, self.wv], axis=1)
        bqkv = jnp.concatenate([self.bq * scale, self.bk, self.bv], axis=0)
        self._wqkv = wqkv.astype(mxu_dtype)
        self._bqkv = bqkv                       # bias stays f32 (post-accumulate add)
        self._wo_h = self.wo.reshape(n_head, self.d_tensor, d_model).astype(mxu_dtype)
        self._bo = self.bo

    def __call__(self, q, k, v, mask=None, *, causal=False):
        B, Sq, D = q.shape
        Sk = k.shape[1]
        H, Dh = self.n_head, self.d_tensor
        mxu = self.mxu_dtype
        out_dtype = q.dtype

        if (q is k) and (k is v):
            # Self-attention: one fused QKV projection (x read from HBM once),
            # then a single reshape/transpose that both slices Q/K/V and splits
            # heads.
            qkv = linear(q.reshape(B * Sq, D), self._wqkv, self._bqkv,
                         out_dtype=mxu, mxu_dtype=mxu)          # (B*Sq, 3D) bf16
            qkv = (qkv.reshape(B, Sq, 3, H, Dh)
                      .transpose(2, 0, 3, 1, 4)
                      .reshape(3, B * H, Sq, Dh))
            qh, kh, vh = qkv[0], qkv[1], qkv[2]
        else:
            # Cross-attention fallback: separate projections against the
            # packed-weight slices (Q slice already carries the 1/sqrt(Dh)).
            qp = linear(q.reshape(B * Sq, D), self._wqkv[:, :D],
                        self._bqkv[:D], out_dtype=mxu, mxu_dtype=mxu)
            kp = linear(k.reshape(B * Sk, D), self._wqkv[:, D:2 * D],
                        self._bqkv[D:2 * D], out_dtype=mxu, mxu_dtype=mxu)
            vp = linear(v.reshape(B * Sk, D), self._wqkv[:, 2 * D:],
                        self._bqkv[2 * D:], out_dtype=mxu, mxu_dtype=mxu)
            qh = _split_heads(qp, B, Sq, H, Dh)
            kh = _split_heads(kp, B, Sk, H, Dh)
            vh = _split_heads(vp, B, Sk, H, Dh)

        attn = flash_attention(qh, kh, vh, mask=mask, n_head=H, causal=causal,
                               mxu_dtype=mxu, out_dtype=mxu)    # (B*H, Sq, Dh)

        # Output projection with 'head' as the reduction axis: consumes the
        # (B*H, Sq, Dh) layout directly — no merge transpose.
        return out_projection(attn, self._wo_h, self._bo, B=B, H=H,
                              out_dtype=out_dtype, mxu_dtype=mxu)


# ---------------------------------------------------------------------------
# Pure-JAX f32 reference (for self-check)
# ---------------------------------------------------------------------------
def reference_mha(mha: MultiHeadAttention, q, k, v, mask=None):
    B, Sq, D = q.shape
    Sk = k.shape[1]
    H, Dh = mha.n_head, mha.d_tensor
    qp = q @ mha.wq + mha.bq
    kp = k @ mha.wk + mha.bk
    vp = v @ mha.wv + mha.bv
    qh = qp.reshape(B, Sq, H, Dh).transpose(0, 2, 1, 3)
    kh = kp.reshape(B, Sk, H, Dh).transpose(0, 2, 1, 3)
    vh = vp.reshape(B, Sk, H, Dh).transpose(0, 2, 1, 3)
    score = jnp.einsum("bhqd,bhkd->bhqk", qh, kh) / jnp.sqrt(jnp.float32(Dh))
    if mask is not None:
        score = score + mask
    attn = jax.nn.softmax(score, axis=-1)
    out = jnp.einsum("bhqk,bhkd->bhqd", attn, vh)
    out = out.transpose(0, 2, 1, 3).reshape(B, Sq, D)
    return out @ mha.wo + mha.bo


if __name__ == "__main__":
    key = jax.random.PRNGKey(0)
    k_param, k_x, k_q, k_k, k_v, k_m = jax.random.split(key, 6)

    batch, seq, d_model, n_head = 2, 8, 32, 4
    mha = MultiHeadAttention(d_model, n_head, k_param)

    # bf16 MXU operands -> compare against the f32 reference at a bf16-level
    # tolerance (accumulation is f32 throughout).
    TOL = dict(atol=3e-2, rtol=3e-2)

    x = jax.random.normal(k_x, (batch, seq, d_model), jnp.float32)

    # --- self-attention (fused QKV path), no mask ---
    out = jax.block_until_ready(mha(x, x, x))
    ref = reference_mha(mha, x, x, x)
    assert out.shape == (batch, seq, d_model)
    assert jnp.allclose(out, ref, **TOL), "mismatch vs reference (no mask)"

    # --- self-attention, causal mask generated in-kernel (no mask in HBM) ---
    out_c = jax.block_until_ready(mha(x, x, x, causal=True))
    causal_mask = jnp.where(
        jnp.tril(jnp.ones((seq, seq), dtype=bool)), 0.0, -1e9
    ).astype(jnp.float32)
    ref_c = reference_mha(mha, x, x, x, mask=causal_mask)
    assert jnp.allclose(out_c, ref_c, **TOL), "mismatch vs reference (causal)"

    # --- self-attention, arbitrary additive mask streamed from HBM,
    #     broadcast over heads via the BlockSpec index_map ---
    add_mask = 0.5 * jax.random.normal(k_m, (batch, 1, seq, seq), jnp.float32)
    out_m = jax.block_until_ready(mha(x, x, x, mask=add_mask))
    ref_m = reference_mha(mha, x, x, x, mask=add_mask)
    assert jnp.allclose(out_m, ref_m, **TOL), "mismatch vs reference (masked)"

    # --- cross-attention (distinct q/k/v tensors; unfused projection path) ---
    q_in = jax.random.normal(k_q, (batch, seq, d_model), jnp.float32)
    k_in = jax.random.normal(k_k, (batch, seq, d_model), jnp.float32)
    v_in = jax.random.normal(k_v, (batch, seq, d_model), jnp.float32)
    out_x = jax.block_until_ready(mha(q_in, k_in, v_in))
    ref_x = reference_mha(mha, q_in, k_in, v_in)
    assert jnp.allclose(out_x, ref_x, **TOL), "mismatch vs reference (cross-attn)"

    print("KERNEL_OK")
</pallas_src>

<mosaic_0001>
module attributes {stable_mosaic.version = 11 : i64} {
  func.func @_linear_kernel(%arg0: i32, %arg1: i32, %arg2: i32, %arg3: memref<16x32xf32, #tpu.memory_space<vmem>>, %arg4: memref<32x96xbf16, #tpu.memory_space<vmem>>, %arg5: memref<1x96xf32, #tpu.memory_space<vmem>>, %arg6: memref<16x96xbf16, #tpu.memory_space<vmem>>, %arg7: memref<16x96xf32, #tpu.memory_space<vmem>>) attributes {dimension_semantics = [#tpu.dimension_semantics<parallel>, #tpu.dimension_semantics<parallel>, #tpu.dimension_semantics<arbitrary>], iteration_bounds = array<i64: 1, 1, 1>, scalar_prefetch = 0 : i64, scratch_operands = 1 : i64, tpu.core_type = #tpu.core_type<tc>, window_params = [{transform_indices = @transform_0, window_bounds = array<i64: 16, 32>}, {transform_indices = @transform_1, window_bounds = array<i64: 32, 96>}, {transform_indices = @transform_2, window_bounds = array<i64: 1, 96>}, {transform_indices = @transform_3, window_bounds = array<i64: 16, 96>}]} {
    %c0_i32 = arith.constant 0 : i32
    %0 = arith.cmpi eq, %arg2, %c0_i32 : i32
    %1 = arith.extui %0 : i1 to i32
    %c0_i32_0 = arith.constant 0 : i32
    %2 = arith.cmpi ne, %1, %c0_i32_0 : i32
    scf.if %2 {
      %cst_10 = arith.constant 0.000000e+00 : f32
      %13 = vector.broadcast %cst_10 : f32 to vector<16x96xf32>
      %c0_11 = arith.constant 0 : index
      %c0_12 = arith.constant 0 : index
      %14 = vector.load %arg7[%c0_11, %c0_12] : memref<16x96xf32, #tpu.memory_space<vmem>>, vector<16x96xf32>
      tpu.vector_store %arg7[%c0_11, %c0_12], %13 {strides = array<i32>} : memref<16x96xf32, #tpu.memory_space<vmem>>, vector<16x96xf32>,
    } else {
    }
    %c0 = arith.constant 0 : index
    %c0_1 = arith.constant 0 : index
    %3 = vector.load %arg3[%c0, %c0_1] : memref<16x32xf32, #tpu.memory_space<vmem>>, vector<16x32xf32>
    %4 = arith.truncf %3 : vector<16x32xf32> to vector<16x32xbf16>
    %c0_2 = arith.constant 0 : index
    %c0_3 = arith.constant 0 : index
    %5 = vector.load %arg4[%c0_2, %c0_3] : memref<32x96xbf16, #tpu.memory_space<vmem>>, vector<32x96xbf16>
    %c0_4 = arith.constant 0 : index
    %c0_5 = arith.constant 0 : index
    %6 = vector.load %arg7[%c0_4, %c0_5] : memref<16x96xf32, #tpu.memory_space<vmem>>, vector<16x96xf32>
    %cst = arith.constant dense<0.000000e+00> : vector<16x96xf32>
    %7 = tpu.matmul %4, %5, %cst {dimension_numbers = #tpu.dot_dimension_numbers<[1], [0], [0], [1], [0, 0, 1, 1], [], []>} : vector<16x32xbf16>, vector<32x96xbf16>, vector<16x96xf32> -> vector<16x96xf32>
    %8 = arith.addf %6, %7 : vector<16x96xf32>
    %c0_6 = arith.constant 0 : index
    %c0_7 = arith.constant 0 : index
    %9 = vector.load %arg7[%c0_6, %c0_7] : memref<16x96xf32, #tpu.memory_space<vmem>>, vector<16x96xf32>
    tpu.vector_store %arg7[%c0_6, %c0_7], %8 {strides = array<i32>} : memref<16x96xf32, #tpu.memory_space<vmem>>, vector<16x96xf32>,
    %c0_i32_8 = arith.constant 0 : i32
    %10 = arith.cmpi eq, %arg2, %c0_i32_8 : i32
    %11 = arith.extui %10 : i1 to i32
    %c0_i32_9 = arith.constant 0 : i32
    %12 = arith.cmpi ne, %11, %c0_i32_9 : i32
    scf.if %12 {
      %c0_10 = arith.constant 0 : index
      %c0_11 = arith.constant 0 : index
      %13 = vector.load %arg7[%c0_10, %c0_11] : memref<16x96xf32, #tpu.memory_space<vmem>>, vector<16x96xf32>
      %c0_12 = arith.constant 0 : index
      %c0_13 = arith.constant 0 : index
      %14 = vector.load %arg5[%c0_12, %c0_13] : memref<1x96xf32, #tpu.memory_space<vmem>>, vector<1x96xf32>
      %15 = vector.broadcast %14 : vector<1x96xf32> to vector<16x96xf32>
      %16 = arith.addf %13, %15 : vector<16x96xf32>
      %17 = arith.truncf %16 : vector<16x96xf32> to vector<16x96xbf16>
      %c0_14 = arith.constant 0 : index
      %c0_15 = arith.constant 0 : index
      %18 = vector.load %arg6[%c0_14, %c0_15] : memref<16x96xbf16, #tpu.memory_space<vmem>>, vector<16x96xbf16>
      tpu.vector_store %arg6[%c0_14, %c0_15], %17 {strides = array<i32>} : memref<16x96xbf16, #tpu.memory_space<vmem>>, vector<16x96xbf16>,
    } else {
    }
    return
  }
  func.func @transform_0(%arg0: i32, %arg1: i32, %arg2: i32) -> (i32, i32) {
    %c0_i32 = arith.constant 0 : i32
    return %arg0, %arg2 : i32, i32
  }
  func.func @transform_1(%arg0: i32, %arg1: i32, %arg2: i32) -> (i32, i32) {
    %c0_i32 = arith.constant 0 : i32
    return %arg2, %arg1 : i32, i32
  }
  func.func @transform_2(%arg0: i32, %arg1: i32, %arg2: i32) -> (i32, i32) {
    %c0_i32 = arith.constant 0 : i32
    %c0_i32_0 = arith.constant 0 : i32
    return %c0_i32, %arg1 : i32, i32
  }
  func.func @transform_3(%arg0: i32, %arg1: i32, %arg2: i32) -> (i32, i32) {
    %c0_i32 = arith.constant 0 : i32
    return %arg0, %arg1 : i32, i32
  }
}

</mosaic_0001>

<llo_original>
// kernel: tpu_custom_call.1
$region0: #{tpu_custom_call.1}
  #allocation0 [shape = 'u32[]', space=smem, size = 0x4, offset = 0x4, fixed_abs, tag = 'smem constant byte address 0x4 - core index']
  #allocation1 [shape = 'u32[144,128]{1,0:T(1,128)}', space=vmem, size = 0x12000, scoped, tag = 'internal scratch']
  #allocation2 [shape = 'f32[16,96]{1,0:T(8,128)}', space=vmem, size = 0x2000, scoped, tag = 'scratch operand']
  %s0 = inlined_call_operand.hbm [shape: f32[16,32], index: 0, kind: input, shape index: {}]
  %s1 = inlined_call_operand.hbm [shape: bf16[32,96], index: 1, kind: input, shape index: {}]
  %s2 = inlined_call_operand.vmem [shape: f32[1,96], index: 2, kind: input, shape index: {}]
  %s3 = inlined_call_operand.hbm [shape: bf16[16,96], index: 3, kind: output, shape index: {}]
  %s4 = sld [smem:[#allocation0]]
  $region38: #{tpu_custom_call.1} parent=0
    _
  %s6 = ssub.s32 1, %s4
  %s7 = scalar_select 0, %s6, %s4
  $region1: #{tpu_custom_call.1} parent=0
    #allocation3 [shape = 'u8[8192]{0}', space=vmem, size = 0x2000, scoped, tag = 'input window, operand 0, single buffered']
    #allocation4 [shape = 's32[1]{0}', space=sflag, size = 0x4, scoped, tag = 'scoped memory for tpu_custom_call.1']
    #allocation5 [shape = 's32[1]{0}', space=sflag, size = 0x4, scoped, tag = 'scoped memory for tpu_custom_call.1']
    #allocation6 [shape = 'u8[8192]{0}', space=vmem, size = 0x2000, scoped, tag = 'input window, operand 1, single buffered']
    #allocation7 [shape = 's32[1]{0}', space=sflag, size = 0x4, scoped, tag = 'scoped memory for tpu_custom_call.1']
    #allocation8 [shape = 'u8[4096]{0}', space=vmem, size = 0x1000, scoped, tag = 'output window, operand 0, single buffered']
    %8 = vsyncpa [#allocation4], 0
    %9 = vsyncpa [#allocation7], 0
    %10 = vsyncpa [#allocation5], 0
    // Predicated region
    $region2: #{tpu_custom_call.1} parent=1 // pred_check
      _
    $region3: #{tpu_custom_call.1} parent=1 // pred_check_branch
      %12 = sbr.rel (0) target = $region5
    $region4: #{tpu_custom_call.1} parent=1 // pred_region
      %s14 = ssub.s32 256, 256
      %15 = vsyncadd [#allocation4], %s14
      %s16 = sshll.u32 [#allocation3], 4
      %s17 = int_to_ptr.vmem [resolvable:$true] %s16
      %22 = dma.hbm_to_vmem [thread:$0]  %s0, 256, %s17, [#allocation4], 128, 128, 8
    $region5: #{tpu_custom_call.1} parent=1 // pred_fallthru
      _
    // Predicated region
    $region6: #{tpu_custom_call.1} parent=1 // pred_check
      _
    $region7: #{tpu_custom_call.1} parent=1 // pred_check_branch
      %24 = sbr.rel (0) target = $region9
    $region8: #{tpu_custom_call.1} parent=1 // pred_region
      %s26 = ssub.s32 256, 256
      %27 = vsyncadd [#allocation7], %s26
      %s28 = sshll.u32 [#allocation6], 4
      %s29 = int_to_ptr.vmem [resolvable:$true] %s28
      %34 = dma.hbm_to_vmem [thread:$0]  %s1, 256, %s29, [#allocation7], 64, 64, 4
    $region9: #{tpu_custom_call.1} parent=1 // pred_fallthru
      _
    // Predicated region
    $region10: #{tpu_custom_call.1} parent=1 // pred_check
      _
    $region11: #{tpu_custom_call.1} parent=1 // pred_check_branch
      %36 = sbr.rel (0) target = $region13
    $region12: #{tpu_custom_call.1} parent=1 // pred_region
      _
    $region13: #{tpu_custom_call.1} parent=1 // pred_fallthru
      _
    // Predicated region
    $region14: #{tpu_custom_call.1} parent=1 // pred_check
      _
    $region15: #{tpu_custom_call.1} parent=1 // pred_check_branch
      %38 = sbr.rel (0) target = $region17
    $region16: #{tpu_custom_call.1} parent=1 // pred_region
      %39 = dma.done [#allocation4], 256
    $region17: #{tpu_custom_call.1} parent=1 // pred_fallthru
      _
    // Predicated region
    $region18: #{tpu_custom_call.1} parent=1 // pred_check
      _
    $region19: #{tpu_custom_call.1} parent=1 // pred_check_branch
      %41 = sbr.rel (0) target = $region21
    $region20: #{tpu_custom_call.1} parent=1 // pred_region
      %42 = dma.done [#allocation7], 256
    $region21: #{tpu_custom_call.1} parent=1 // pred_fallthru
      _
    %p44 = scmp.eq.s32.totalorder 0, 0
    // Predicated region
    $region22: #{tpu_custom_call.1} parent=1 // pred_check
      %p45 = pneg %p44
    $region23: #{tpu_custom_call.1} parent=1 // pred_check_branch
      %47 = sbr.rel (%p45) target = $region25
    $region24: #{tpu_custom_call.1} parent=1 // pred_region
      %vm48 = vcmask 785408
      %49 = vst.msk [vmem:[#allocation2] sm:$0xff] %vm48, 0.0
      %50 = vst.msk [vmem:[#allocation2 + $0x8] sm:$0xff] %vm48, 0.0
    $region25: #{tpu_custom_call.1} parent=1 // pred_fallthru
      _
    %v51 = vld [vmem:[#allocation3] sm:$0xff]
    %v52 = vld [vmem:[#allocation3 + $0x8] sm:$0xff]
    %v53 = vpack.c.bf16 %v52, %v51
    %v54 = vld [vmem:[#allocation6] sm:$0xf]
    %v55 = vld [vmem:[#allocation6 + $0x4] sm:$0xf]
    %v56 = vld [vmem:[#allocation6 + $0x8] sm:$0xf]
    %v57 = vld [vmem:[#allocation6 + $0xc] sm:$0xf]
    %v58 = vld [vmem:[#allocation2] sm:$0xff]
    %v59 = vld [vmem:[#allocation2 + $0x8] sm:$0xff]
    %v64 = vunpack.c.l.b16 %v54
    %v65 = vunpack.c.l.b16 %v55
    %v66 = vunpack.c.l.b16 %v56
    %v67 = vunpack.c.l.b16 %v57
    %v68 = vpack.c.b16 %v65, %v64
    %v69 = vpack.c.b16 %v67, %v66
    %vm72 = vcmask 261120
    %v74 = vsel %vm72, %v53, 0
    %76 = vmatprep.subr.bf16.mxu0 0
    %77 = vmatpush1.bf16.msra.mxu0 %v68
    %78 = vmatprep.subr.bf16.mxu0 0
    %79 = vmatpush1.bf16.msra.mxu0 %v69
    %80 = vmatprep.subr.bf16.mxu0 0
    %81 = vmatpush1.bf16.msra.mxu0 0
    %82 = vmatprep.subr.bf16.mxu0 0
    %83 = vmatpush1.bf16.msra.mxu0 0
    %84 = vmatprep.subr.bf16.mxu0 0
    %85 = vmatpush1.bf16.msra.mxu0 0
    %86 = vmatprep.subr.bf16.mxu0 0
    %87 = vmatpush1.bf16.msra.mxu0 0
    %88 = vmatprep.subr.bf16.mxu0 0
    %89 = vmatpush1.bf16.msra.mxu0 0
    %90 = vmatprep.subr.bf16.mxu0 0
    %91 = vmatpush1.bf16.msra.mxu0 0
    %92 = vmatprep.subr.bf16.mxu0 0
    %93 = vmatpush1.bf16.msra.mxu0 0
    %94 = vmatprep.subr.bf16.mxu0 0
    %95 = vmatpush1.bf16.msra.mxu0 0
    %96 = vmatprep.subr.bf16.mxu0 0
    %97 = vmatpush1.bf16.msra.mxu0 0
    %98 = vmatprep.subr.bf16.mxu0 0
    %99 = vmatpush1.bf16.msra.mxu0 0
    %100 = vmatprep.subr.bf16.mxu0 0
    %101 = vmatpush1.bf16.msra.mxu0 0
    %102 = vmatprep.subr.bf16.mxu0 0
    %103 = vmatpush1.bf16.msra.mxu0 0
    %104 = vmatprep.subr.bf16.mxu0 0
    %105 = vmatpush1.bf16.msra.mxu0 0
    %106 = vmatprep.subr.bf16.mxu0 0
    %107 = vmatpush1.bf16.msra.mxu0 0
    %108 = vmatprep.mubr.bf16.mxu0 0
    %109 = vmatmul.mubr.bf16.gmra.mrb[0].mxu0 %v74
    %v110 = vpop.f32.mrb[0].mxu0
    %v111 = vadd.f32 0.0, %v110
    %v112 = vpop.f32.mrb[0].mxu0
    %v113 = vpop.f32.mrb[0].mxu0
    %v114 = vadd.f32 0.0, %v113
    %v115 = vpop.f32.mrb[0].mxu0
    %116 = vdwg.mxu0
    %v117 = vadd.f32 %v58, %v111
    %v118 = vadd.f32 %v59, %v114
    %vm119 = vcmask 785408
    %120 = vst.msk [vmem:[#allocation2] sm:$0xff] %vm119, %v117
    %121 = vst.msk [vmem:[#allocation2 + $0x8] sm:$0xff] %vm119, %v118
    // Predicated region
    $region26: #{tpu_custom_call.1} parent=1 // pred_check
      %p122 = pneg %p44
    $region27: #{tpu_custom_call.1} parent=1 // pred_check_branch
      %124 = sbr.rel (%p122) target = $region29
    $region28: #{tpu_custom_call.1} parent=1 // pred_region
      %v125 = vld [vmem:[#allocation2] sm:$0xff]
      %v126 = vld [vmem:[#allocation2 + $0x8] sm:$0xff]
      %v127 = vld [vmem:[%s2] sm:$0x1]
      %v129 = vlaneseq
      %v130 = vshrl.u32 %v129, 7
      %v131 = vsub.s32 0, %v130
      %v132 = vrot.slane %v127, %v131
      %v134 = vadd.f32 %v125, %v132
      %v135 = vadd.f32 %v126, %v132
      %v136 = vpack.c.bf16 %v135, %v134
      %v138 = vunpack.c.l.b16 %v136
      %v139 = vunpack.c.h.b16 %v136
      %v140 = vpack.c.b16 %v138, %v138
      %v141 = vpack.c.b16 %v139, %v139
      %vm144 = vcmask 781312
      %145 = vst.msk [vmem:[#allocation8] sm:$0xf] %vm144, %v140
      %146 = vst.msk [vmem:[#allocation8 + $0x4] sm:$0xf] %vm144, %v141
    $region29: #{tpu_custom_call.1} parent=1 // pred_fallthru
      _
    // Predicated region
    $region30: #{tpu_custom_call.1} parent=1 // pred_check
      _
    $region31: #{tpu_custom_call.1} parent=1 // pred_check_branch
      %148 = sbr.rel (0) target = $region33
    $region32: #{tpu_custom_call.1} parent=1 // pred_region
      %s150 = ssub.s32 128, 128
      %151 = vsyncadd [#allocation5], %s150
      %s152 = sshll.u32 [#allocation8], 4
      %s153 = int_to_ptr.vmem [resolvable:$true] %s152
      %158 = dma.vmem_to_hbm [thread:$0]  %s153, 128, %s3, [#allocation5], 64, 64, 4
    $region33: #{tpu_custom_call.1} parent=1 // pred_fallthru
      _
    // Predicated region
    $region34: #{tpu_custom_call.1} parent=1 // pred_check
      _
    $region35: #{tpu_custom_call.1} parent=1 // pred_check_branch
      %160 = sbr.rel (0) target = $region37
    $region36: #{tpu_custom_call.1} parent=1 // pred_region
      %161 = dma.done [#allocation5], 128
    $region37: #{tpu_custom_call.1} parent=1 // pred_fallthru
      _
    %162 = vsyncpa [#allocation4], 1
    %163 = vsyncpa [#allocation7], 1
    %164 = vsyncpa [#allocation5], 1

</llo_original>
